<compile_context>
chip_gen: v5e
topology: v5e:2x2
jax: 0.10.0
libtpu: 0.0.40
codegen_flags: <defaults>
</compile_context>

<pallas_src>
import math

import jax
import jax.numpy as jnp
from jax import lax
from jax.experimental import pallas as pl
from jax.experimental.pallas import tpu as pltpu

_EPS = 1e-6
_LANE = 128


# --------------------------------------------------------------------------
# helpers
# --------------------------------------------------------------------------
def _round_up(v, m):
    return ((v + m - 1) // m) * m


def _choose_tile(n_rows, per_row_bytes, fixed_bytes, cap=512, budget=56 << 20):
    """Row tile: multiple of 8 (or == n_rows for tiny inputs), >= 2 grid steps
    when possible (v7x dual-TC), shrunk until the double-buffered working set
    fits a conservative VMEM budget."""
    if n_rows < 16:
        return max(n_rows, 1)
    tm = max(8, min(cap, _round_up(-(-n_rows // 2), 8)))
    while tm > 8 and fixed_bytes + 2 * tm * per_row_bytes > budget:
        tm = max(8, _round_up(tm // 2, 8))
    return tm


def _compiler_params(sem, working_set_bytes):
    # Explicit scoped-VMEM budget (defaults: 16 MiB v5e / 32 MiB v6e+v7x),
    # clamped to 64 MiB so it is also valid on v7x.
    return pltpu.CompilerParams(
        dimension_semantics=sem,
        vmem_limit_bytes=int(min(max(working_set_bytes + (8 << 20), 32 << 20),
                                 64 << 20)))


def _silu_bf16(c_f32):
    # exp -> EUP, approx reciprocal -> EUP; keeps VPU slots for LN/modulate.
    sig = pl.reciprocal(1.0 + jnp.exp(-c_f32), approx=True)
    return (c_f32 * sig).astype(jnp.bfloat16)


# --------------------------------------------------------------------------
# kernels
# --------------------------------------------------------------------------
def _fused_token_kernel(x_ref, c_ref, w_sh_ref, b_sh_ref, w_sc_ref, b_sc_ref,
                        w_out_ref, b_out_ref, o_ref):
    """Per-token conditioning: SiLU + adaLN matmuls + LN + modulate + proj."""
    x = x_ref[...].astype(jnp.float32)
    c = c_ref[...].astype(jnp.float32)

    # adaLN_modulation = Linear(SiLU(c)); bf16 MXU operands, f32 accumulation.
    silu_c = _silu_bf16(c)
    shift = jnp.dot(silu_c, w_sh_ref[...],
                    preferred_element_type=jnp.float32) + b_sh_ref[...]
    scale = jnp.dot(silu_c, w_sc_ref[...],
                    preferred_element_type=jnp.float32) + b_sc_ref[...]

    # LayerNorm (no affine), f32 statistics.
    mean = jnp.mean(x, axis=-1, keepdims=True)
    xc = x - mean
    var = jnp.mean(xc * xc, axis=-1, keepdims=True)
    x_norm = xc * lax.rsqrt(var + _EPS)

    x_mod = (x_norm * (1.0 + scale) + shift).astype(jnp.bfloat16)
    out = jnp.dot(x_mod, w_out_ref[...],
                  preferred_element_type=jnp.float32) + b_out_ref[...]
    o_ref[...] = out.astype(o_ref.dtype)


def _adaln_kernel(c_ref, w_sh_ref, b_sh_ref, w_sc_ref, b_sc_ref,
                  shift_ref, scale_ref):
    """Per-sample adaLN projection: runs once over the B distinct c rows."""
    c = c_ref[...].astype(jnp.float32)
    silu_c = _silu_bf16(c)
    shift_ref[...] = (jnp.dot(silu_c, w_sh_ref[...],
                              preferred_element_type=jnp.float32)
                      + b_sh_ref[...]).astype(shift_ref.dtype)
    scale_ref[...] = (jnp.dot(silu_c, w_sc_ref[...],
                              preferred_element_type=jnp.float32)
                      + b_sc_ref[...]).astype(scale_ref.dtype)


def _modproj_kernel(x_ref, shift_ref, scale_ref, w_out_ref, b_out_ref, o_ref):
    """Per-sample conditioning: LN + modulate (precomputed shift/scale) + proj."""
    x = x_ref[0].astype(jnp.float32)     # (tt, H)
    shift = shift_ref[0]                 # (1, H) f32, broadcasts over tt rows
    scale = scale_ref[0]

    mean = jnp.mean(x, axis=-1, keepdims=True)
    xc = x - mean
    var = jnp.mean(xc * xc, axis=-1, keepdims=True)
    x_norm = xc * lax.rsqrt(var + _EPS)

    x_mod = (x_norm * (1.0 + scale) + shift).astype(jnp.bfloat16)
    out = jnp.dot(x_mod, w_out_ref[...],
                  preferred_element_type=jnp.float32) + b_out_ref[...]
    o_ref[0] = out.astype(o_ref.dtype)


# --------------------------------------------------------------------------
# wrappers
# --------------------------------------------------------------------------
def _forward_per_token(x, c, w_sh, b_sh, w_sc, b_sc, w_out, b_out, out_pad):
    B, T, H = x.shape
    n = B * T
    x2 = x.reshape(n, H)
    c2 = c.reshape(n, H)

    itm = x.dtype.itemsize
    # weights double-buffered (conservative) + biases
    fixed = 2 * (2 * H * H * 2 + H * out_pad * 2 + (2 * H + out_pad) * 4)
    per_row = 2 * H * itm + out_pad * itm          # x row + c row + out row
    tm = _choose_tile(n, per_row, fixed)
    grid = (pl.cdiv(n, tm),)                       # ragged last block is masked

    row_spec = pl.BlockSpec((tm, H), lambda i: (i, 0))
    const2 = lambda shape: pl.BlockSpec(shape, lambda i: (0, 0))

    out2 = pl.pallas_call(
        _fused_token_kernel,
        grid=grid,
        in_specs=[
            row_spec,                       # x
            row_spec,                       # c (genuinely per-token)
            const2((H, H)),                 # w_shift (bf16)
            const2((1, H)),                 # b_shift
            const2((H, H)),                 # w_scale (bf16)
            const2((1, H)),                 # b_scale
            const2((H, out_pad)),           # w_out (bf16, lane-padded)
            const2((1, out_pad)),           # b_out
        ],
        out_specs=pl.BlockSpec((tm, out_pad), lambda i: (i, 0)),
        out_shape=jax.ShapeDtypeStruct((n, out_pad), x.dtype),
        compiler_params=_compiler_params(("parallel",),
                                         fixed + 2 * tm * per_row),
    )(x2, c2, w_sh, b_sh, w_sc, b_sc, w_out, b_out)
    return out2.reshape(B, T, out_pad)


def _forward_per_sample(x, c_s, w_sh, b_sh, w_sc, b_sc, w_out, b_out, out_pad):
    B, T, H = x.shape
    itm = x.dtype.itemsize
    const2 = lambda shape: pl.BlockSpec(shape, lambda i: (0, 0))

    # 1) adaLN projection over the B distinct conditioning rows (one step).
    adaln_ws = 2 * (2 * H * H * 2 + (B + 2) * H * 4) + 2 * B * H * 4
    shift, scale = pl.pallas_call(
        _adaln_kernel,
        grid=(1,),
        in_specs=[const2((B, H)), const2((H, H)), const2((1, H)),
                  const2((H, H)), const2((1, H))],
        out_specs=(const2((B, H)), const2((B, H))),
        out_shape=(jax.ShapeDtypeStruct((B, H), jnp.float32),
                   jax.ShapeDtypeStruct((B, H), jnp.float32)),
        compiler_params=_compiler_params(("arbitrary",), adaln_ws),
    )(c_s, w_sh, b_sh, w_sc, b_sc)

    shift3 = shift.reshape(B, 1, H)
    scale3 = scale.reshape(B, 1, H)

    # 2) LN + modulate + output projection over a (sample, token-block) grid.
    fixed = 2 * (H * out_pad * 2 + out_pad * 4 + 2 * H * 4)
    per_row = H * itm + out_pad * itm
    tt = _choose_tile(T, per_row, fixed)
    grid = (B, pl.cdiv(T, tt))

    out = pl.pallas_call(
        _modproj_kernel,
        grid=grid,
        in_specs=[
            pl.BlockSpec((1, tt, H), lambda b, t: (b, t, 0)),      # x
            pl.BlockSpec((1, 1, H), lambda b, t: (b, 0, 0)),       # shift
            pl.BlockSpec((1, 1, H), lambda b, t: (b, 0, 0)),       # scale
            pl.BlockSpec((H, out_pad), lambda b, t: (0, 0)),       # w_out
            pl.BlockSpec((1, out_pad), lambda b, t: (0, 0)),       # b_out
        ],
        out_specs=pl.BlockSpec((1, tt, out_pad), lambda b, t: (b, t, 0)),
        out_shape=jax.ShapeDtypeStruct((B, T, out_pad), x.dtype),
        compiler_params=_compiler_params(("parallel", "parallel"),
                                         fixed + 2 * tt * per_row),
    )(x, shift3, scale3, w_out, b_out)
    return out


def final_layer_forward(x, c, w_ada, b_ada, w_lin, b_lin):
    """Fused FinalLayer forward.

    x: (B, T, H).  c: (B, T, H) per-token or (B, 1, H) / (B, H) per-sample.
    w_ada: (H, 2H) with [shift | scale] output columns, (in, out) oriented
    (transpose nn.Linear's (out, in) weight when porting real checkpoints).
    w_lin: (H, out_dim).
    """
    B, T, H = x.shape
    if c.ndim == 2:
        c = c[:, None, :]
    Tc = c.shape[1]
    out_dim = w_lin.shape[-1]
    out_pad = max(_round_up(out_dim, _LANE), _LANE)   # lane-dense output

    # Parameter plumbing (done once; constant-folded under jit).
    w_sh = w_ada[:, :H].astype(jnp.bfloat16)
    w_sc = w_ada[:, H:].astype(jnp.bfloat16)
    b_sh = b_ada[:H].reshape(1, H).astype(jnp.float32)
    b_sc = b_ada[H:].reshape(1, H).astype(jnp.float32)
    w_out = jnp.zeros((H, out_pad), jnp.bfloat16).at[:, :out_dim].set(
        w_lin.astype(jnp.bfloat16))
    b_out = jnp.zeros((1, out_pad), jnp.float32).at[:, :out_dim].set(
        b_lin.astype(jnp.float32))

    if Tc == 1:
        out = _forward_per_sample(x, c[:, 0, :], w_sh, b_sh, w_sc, b_sc,
                                  w_out, b_out, out_pad)
    elif Tc == T:
        out = _forward_per_token(x, c, w_sh, b_sh, w_sc, b_sc,
                                 w_out, b_out, out_pad)
    else:
        raise ValueError(f"c seq dim {Tc} is not broadcastable against T={T}")

    if out_pad != out_dim:
        out = out[..., :out_dim]
    return out


class FinalLayer:
    """JAX/Pallas port of the PyTorch DiT FinalLayer (forward only)."""

    def __init__(self, hidden_size, patch_size, out_channels, key):
        out_dim = patch_size * out_channels
        k1, k2, k3, k4 = jax.random.split(key, 4)
        lim = 1.0 / math.sqrt(hidden_size)
        # nn.Linear default init: U(-1/sqrt(fan_in), 1/sqrt(fan_in)); weights
        # stored (in, out) here.
        self.w_ada = jax.random.uniform(k1, (hidden_size, 2 * hidden_size),
                                        jnp.float32, -lim, lim)
        self.b_ada = jax.random.uniform(k2, (2 * hidden_size,),
                                        jnp.float32, -lim, lim)
        self.w_lin = jax.random.uniform(k3, (hidden_size, out_dim),
                                        jnp.float32, -lim, lim)
        self.b_lin = jax.random.uniform(k4, (out_dim,), jnp.float32, -lim, lim)

    def __call__(self, x, c):
        return final_layer_forward(x, c, self.w_ada, self.b_ada,
                                   self.w_lin, self.b_lin)


def _final_layer_ref(x, c, w_ada, b_ada, w_lin, b_lin, eps=1e-6):
    """Pure-JAX f32 reference matching the PyTorch module."""
    silu_c = c * jax.nn.sigmoid(c)
    mod = silu_c @ w_ada + b_ada
    shift, scale = jnp.split(mod, 2, axis=-1)
    mean = x.mean(-1, keepdims=True)
    var = ((x - mean) ** 2).mean(-1, keepdims=True)
    x_norm = (x - mean) / jnp.sqrt(var + eps)
    x_mod = x_norm * (1.0 + scale) + shift
    return x_mod @ w_lin + b_lin


if __name__ == "__main__":
    key = jax.random.PRNGKey(0)
    k_params, k_x, k_c, k_c2 = jax.random.split(key, 4)

    batch, seq, hidden = 2, 8, 32
    patch_size, out_channels = 2, 4
    out_dim = patch_size * out_channels

    layer = FinalLayer(hidden, patch_size, out_channels, k_params)
    x = jax.random.normal(k_x, (batch, seq, hidden), jnp.float32)

    # bf16 MXU operands -> loosened tolerance vs. the f32 reference.
    tol = dict(atol=5e-2, rtol=5e-2)

    # Per-token conditioning path (c matches x token-for-token).
    c_tok = jax.random.normal(k_c, (batch, seq, hidden), jnp.float32)
    out_tok = layer(x, c_tok)
    jax.block_until_ready(out_tok)
    ref_tok = _final_layer_ref(x, c_tok, layer.w_ada, layer.b_ada,
                               layer.w_lin, layer.b_lin)
    assert out_tok.shape == (batch, seq, out_dim)
    assert jnp.allclose(out_tok, ref_tok, **tol), (
        "per-token mismatch, max abs err = "
        f"{float(jnp.max(jnp.abs(out_tok - ref_tok)))}")

    # Per-sample conditioning path (standard DiT): adaLN hoisted out of the
    # per-token loop, c never broadcast to (B, T, H).
    c_samp = jax.random.normal(k_c2, (batch, 1, hidden), jnp.float32)
    out_samp = layer(x, c_samp)
    jax.block_until_ready(out_samp)
    ref_samp = _final_layer_ref(x, c_samp, layer.w_ada, layer.b_ada,
                                layer.w_lin, layer.b_lin)
    assert out_samp.shape == (batch, seq, out_dim)
    assert jnp.allclose(out_samp, ref_samp, **tol), (
        "per-sample mismatch, max abs err = "
        f"{float(jnp.max(jnp.abs(out_samp - ref_samp)))}")

    print("KERNEL_OK")
</pallas_src>

<mosaic_0001>
module attributes {stable_mosaic.version = 11 : i64} {
  func.func @_fused_token_kernel(%arg0: i32, %arg1: memref<8x32xf32, #tpu.memory_space<vmem>>, %arg2: memref<8x32xf32, #tpu.memory_space<vmem>>, %arg3: memref<32x32xbf16, #tpu.memory_space<vmem>>, %arg4: memref<1x32xf32, #tpu.memory_space<vmem>>, %arg5: memref<32x32xbf16, #tpu.memory_space<vmem>>, %arg6: memref<1x32xf32, #tpu.memory_space<vmem>>, %arg7: memref<32x128xbf16, #tpu.memory_space<vmem>>, %arg8: memref<1x128xf32, #tpu.memory_space<vmem>>, %arg9: memref<8x128xf32, #tpu.memory_space<vmem>>) attributes {dimension_semantics = [#tpu.dimension_semantics<parallel>], iteration_bounds = array<i64: 2>, scalar_prefetch = 0 : i64, scratch_operands = 0 : i64, tpu.core_type = #tpu.core_type<tc>, window_params = [{transform_indices = @transform_0, window_bounds = array<i64: 8, 32>}, {transform_indices = @transform_1, window_bounds = array<i64: 8, 32>}, {pipeline_mode = #tpu.pipeline_mode<synchronous>, transform_indices = @transform_2, window_bounds = array<i64: 32, 32>}, {pipeline_mode = #tpu.pipeline_mode<synchronous>, transform_indices = @transform_3, window_bounds = array<i64: 1, 32>}, {pipeline_mode = #tpu.pipeline_mode<synchronous>, transform_indices = @transform_4, window_bounds = array<i64: 32, 32>}, {pipeline_mode = #tpu.pipeline_mode<synchronous>, transform_indices = @transform_5, window_bounds = array<i64: 1, 32>}, {pipeline_mode = #tpu.pipeline_mode<synchronous>, transform_indices = @transform_6, window_bounds = array<i64: 32, 128>}, {pipeline_mode = #tpu.pipeline_mode<synchronous>, transform_indices = @transform_7, window_bounds = array<i64: 1, 128>}, {transform_indices = @transform_8, window_bounds = array<i64: 8, 128>}]} {
    %c0 = arith.constant 0 : index
    %c0_0 = arith.constant 0 : index
    %0 = vector.load %arg1[%c0, %c0_0] : memref<8x32xf32, #tpu.memory_space<vmem>>, vector<8x32xf32>
    %c0_1 = arith.constant 0 : index
    %c0_2 = arith.constant 0 : index
    %1 = vector.load %arg2[%c0_1, %c0_2] : memref<8x32xf32, #tpu.memory_space<vmem>>, vector<8x32xf32>
    %cst = arith.constant 0.000000e+00 : f32
    %2 = vector.broadcast %cst : f32 to vector<8x32xf32>
    %3 = arith.subf %2, %1 : vector<8x32xf32>
    %4 = math.exp %3 : vector<8x32xf32>
    %cst_3 = arith.constant 1.000000e+00 : f32
    %5 = vector.broadcast %cst_3 : f32 to vector<8x32xf32>
    %6 = arith.addf %5, %4 : vector<8x32xf32>
    %7 = tpu.reciprocal %6 {approx = true} : vector<8x32xf32> -> vector<8x32xf32>
    %8 = arith.mulf %1, %7 : vector<8x32xf32>
    %9 = arith.truncf %8 : vector<8x32xf32> to vector<8x32xbf16>
    %c0_4 = arith.constant 0 : index
    %c0_5 = arith.constant 0 : index
    %10 = vector.load %arg3[%c0_4, %c0_5] : memref<32x32xbf16, #tpu.memory_space<vmem>>, vector<32x32xbf16>
    %cst_6 = arith.constant dense<0.000000e+00> : vector<8x32xf32>
    %11 = tpu.matmul %9, %10, %cst_6 {dimension_numbers = #tpu.dot_dimension_numbers<[1], [0], [0], [1], [0, 0, 1, 1], [], []>} : vector<8x32xbf16>, vector<32x32xbf16>, vector<8x32xf32> -> vector<8x32xf32>
    %c0_7 = arith.constant 0 : index
    %c0_8 = arith.constant 0 : index
    %12 = vector.load %arg4[%c0_7, %c0_8] : memref<1x32xf32, #tpu.memory_space<vmem>>, vector<1x32xf32>
    %13 = vector.broadcast %12 : vector<1x32xf32> to vector<8x32xf32>
    %14 = arith.addf %11, %13 : vector<8x32xf32>
    %c0_9 = arith.constant 0 : index
    %c0_10 = arith.constant 0 : index
    %15 = vector.load %arg5[%c0_9, %c0_10] : memref<32x32xbf16, #tpu.memory_space<vmem>>, vector<32x32xbf16>
    %cst_11 = arith.constant dense<0.000000e+00> : vector<8x32xf32>
    %16 = tpu.matmul %9, %15, %cst_11 {dimension_numbers = #tpu.dot_dimension_numbers<[1], [0], [0], [1], [0, 0, 1, 1], [], []>} : vector<8x32xbf16>, vector<32x32xbf16>, vector<8x32xf32> -> vector<8x32xf32>
    %c0_12 = arith.constant 0 : index
    %c0_13 = arith.constant 0 : index
    %17 = vector.load %arg6[%c0_12, %c0_13] : memref<1x32xf32, #tpu.memory_space<vmem>>, vector<1x32xf32>
    %18 = vector.broadcast %17 : vector<1x32xf32> to vector<8x32xf32>
    %19 = arith.addf %16, %18 : vector<8x32xf32>
    %cst_14 = arith.constant dense<0.000000e+00> : vector<8xf32>
    %20 = vector.multi_reduction <add>, %0, %cst_14 [1] : vector<8x32xf32> to vector<8xf32>
    %21 = vector.shape_cast %20 : vector<8xf32> to vector<8x1xf32>
    %cst_15 = arith.constant 3.200000e+01 : f32
    %22 = vector.broadcast %cst_15 : f32 to vector<8x1xf32>
    %23 = arith.divf %21, %22 : vector<8x1xf32>
    %24 = vector.broadcast %23 : vector<8x1xf32> to vector<8x32xf32>
    %25 = arith.subf %0, %24 : vector<8x32xf32>
    %26 = arith.mulf %25, %25 : vector<8x32xf32>
    %cst_16 = arith.constant dense<0.000000e+00> : vector<8xf32>
    %27 = vector.multi_reduction <add>, %26, %cst_16 [1] : vector<8x32xf32> to vector<8xf32>
    %28 = vector.shape_cast %27 : vector<8xf32> to vector<8x1xf32>
    %cst_17 = arith.constant 3.200000e+01 : f32
    %29 = vector.broadcast %cst_17 : f32 to vector<8x1xf32>
    %30 = arith.divf %28, %29 : vector<8x1xf32>
    %cst_18 = arith.constant 9.99999997E-7 : f32
    %31 = vector.broadcast %cst_18 : f32 to vector<8x1xf32>
    %32 = arith.addf %30, %31 : vector<8x1xf32>
    %33 = math.rsqrt %32 : vector<8x1xf32>
    %34 = vector.broadcast %33 : vector<8x1xf32> to vector<8x32xf32>
    %35 = arith.mulf %25, %34 : vector<8x32xf32>
    %cst_19 = arith.constant 1.000000e+00 : f32
    %36 = vector.broadcast %cst_19 : f32 to vector<8x32xf32>
    %37 = arith.addf %36, %19 : vector<8x32xf32>
    %38 = arith.mulf %35, %37 : vector<8x32xf32>
    %39 = arith.addf %38, %14 : vector<8x32xf32>
    %40 = arith.truncf %39 : vector<8x32xf32> to vector<8x32xbf16>
    %c0_20 = arith.constant 0 : index
    %c0_21 = arith.constant 0 : index
    %41 = vector.load %arg7[%c0_20, %c0_21] : memref<32x128xbf16, #tpu.memory_space<vmem>>, vector<32x128xbf16>
    %cst_22 = arith.constant dense<0.000000e+00> : vector<8x128xf32>
    %42 = tpu.matmul %40, %41, %cst_22 {dimension_numbers = #tpu.dot_dimension_numbers<[1], [0], [0], [1], [0, 0, 1, 1], [], []>} : vector<8x32xbf16>, vector<32x128xbf16>, vector<8x128xf32> -> vector<8x128xf32>
    %c0_23 = arith.constant 0 : index
    %c0_24 = arith.constant 0 : index
    %43 = vector.load %arg8[%c0_23, %c0_24] : memref<1x128xf32, #tpu.memory_space<vmem>>, vector<1x128xf32>
    %44 = vector.broadcast %43 : vector<1x128xf32> to vector<8x128xf32>
    %45 = arith.addf %42, %44 : vector<8x128xf32>
    %c0_25 = arith.constant 0 : index
    %c0_26 = arith.constant 0 : index
    %46 = vector.load %arg9[%c0_25, %c0_26] : memref<8x128xf32, #tpu.memory_space<vmem>>, vector<8x128xf32>
    tpu.vector_store %arg9[%c0_25, %c0_26], %45 {strides = array<i32>} : memref<8x128xf32, #tpu.memory_space<vmem>>, vector<8x128xf32>,
    return
  }
  func.func @transform_0(%arg0: i32) -> (i32, i32) {
    %c0_i32 = arith.constant 0 : i32
    %c0_i32_0 = arith.constant 0 : i32
    return %arg0, %c0_i32 : i32, i32
  }
  func.func @transform_1(%arg0: i32) -> (i32, i32) {
    %c0_i32 = arith.constant 0 : i32
    %c0_i32_0 = arith.constant 0 : i32
    return %arg0, %c0_i32 : i32, i32
  }
  func.func @transform_2(%arg0: i32) -> (i32, i32) {
    %c0_i32 = arith.constant 0 : i32
    %c0_i32_0 = arith.constant 0 : i32
    %c0_i32_1 = arith.constant 0 : i32
    return %c0_i32, %c0_i32_0 : i32, i32
  }
  func.func @transform_3(%arg0: i32) -> (i32, i32) {
    %c0_i32 = arith.constant 0 : i32
    %c0_i32_0 = arith.constant 0 : i32
    %c0_i32_1 = arith.constant 0 : i32
    return %c0_i32, %c0_i32_0 : i32, i32
  }
  func.func @transform_4(%arg0: i32) -> (i32, i32) {
    %c0_i32 = arith.constant 0 : i32
    %c0_i32_0 = arith.constant 0 : i32
    %c0_i32_1 = arith.constant 0 : i32
    return %c0_i32, %c0_i32_0 : i32, i32
  }
  func.func @transform_5(%arg0: i32) -> (i32, i32) {
    %c0_i32 = arith.constant 0 : i32
    %c0_i32_0 = arith.constant 0 : i32
    %c0_i32_1 = arith.constant 0 : i32
    return %c0_i32, %c0_i32_0 : i32, i32
  }
  func.func @transform_6(%arg0: i32) -> (i32, i32) {
    %c0_i32 = arith.constant 0 : i32
    %c0_i32_0 = arith.constant 0 : i32
    %c0_i32_1 = arith.constant 0 : i32
    return %c0_i32, %c0_i32_0 : i32, i32
  }
  func.func @transform_7(%arg0: i32) -> (i32, i32) {
    %c0_i32 = arith.constant 0 : i32
    %c0_i32_0 = arith.constant 0 : i32
    %c0_i32_1 = arith.constant 0 : i32
    return %c0_i32, %c0_i32_0 : i32, i32
  }
  func.func @transform_8(%arg0: i32) -> (i32, i32) {
    %c0_i32 = arith.constant 0 : i32
    %c0_i32_0 = arith.constant 0 : i32
    return %arg0, %c0_i32 : i32, i32
  }
}

</mosaic_0001>

<llo_original>
// kernel: tpu_custom_call.1
$region0: #{tpu_custom_call.1}
  #allocation0 [shape = 'u32[]', space=smem, size = 0x4, offset = 0x4, fixed_abs, tag = 'smem constant byte address 0x4 - core index']
  #allocation1 [shape = 'u32[72,128]{1,0:T(1,128)}', space=vmem, size = 0x9000, scoped, tag = 'internal scratch']
  %s0 = inlined_call_operand.hbm [shape: f32[16,32], index: 0, kind: input, shape index: {}]
  %s1 = inlined_call_operand.hbm [shape: f32[16,32], index: 1, kind: input, shape index: {}]
  %s2 = inlined_call_operand.hbm [shape: bf16[32,32], index: 2, kind: input, shape index: {}]
  %s3 = inlined_call_operand.vmem [shape: f32[1,32], index: 3, kind: input, shape index: {}]
  %s4 = inlined_call_operand.hbm [shape: bf16[32,32], index: 4, kind: input, shape index: {}]
  %s5 = inlined_call_operand.vmem [shape: f32[1,32], index: 5, kind: input, shape index: {}]
  %s6 = inlined_call_operand.hbm [shape: bf16[32,128], index: 6, kind: input, shape index: {}]
  %s7 = inlined_call_operand.vmem [shape: f32[1,128], index: 7, kind: input, shape index: {}]
  %s8 = inlined_call_operand.hbm [shape: f32[16,128], index: 8, kind: output, shape index: {}]
  %s9 = sld [smem:[#allocation0]]
  $region85: #{tpu_custom_call.1} parent=0
    _
  %s11 = ssub.s32 1, %s9
  %s12 = scalar_select 0, %s11, %s9
  $region1: #{tpu_custom_call.1} parent=0
    #allocation2 [shape = 'u8[8192]{0}', space=vmem, size = 0x2000, scoped, tag = 'input window, operand 0']
    #allocation3 [shape = 's32[2]{0}', space=sflag, size = 0x8, scoped, tag = 'scoped memory for tpu_custom_call.1']
    #allocation4 [shape = 's32[2]{0}', space=sflag, size = 0x8, scoped, tag = 'scoped memory for tpu_custom_call.1']
    #allocation5 [shape = 'u8[8192]{0}', space=vmem, size = 0x2000, scoped, tag = 'input window, operand 1']
    #allocation6 [shape = 's32[2]{0}', space=sflag, size = 0x8, scoped, tag = 'scoped memory for tpu_custom_call.1']
    #allocation7 [shape = 'u8[8192]{0}', space=vmem, size = 0x2000, scoped, tag = 'input window, operand 2, single buffered']
    #allocation8 [shape = 'u8[8192]{0}', space=vmem, size = 0x2000, scoped, tag = 'input window, operand 4, single buffered']
    #allocation9 [shape = 's32[1]{0}', space=sflag, size = 0x4, scoped, tag = 'scoped memory for tpu_custom_call.1']
    #allocation10 [shape = 'u8[8192]{0}', space=vmem, size = 0x2000, scoped, tag = 'input window, operand 6, single buffered']
    #allocation11 [shape = 'u8[8192]{0}', space=vmem, size = 0x2000, scoped, tag = 'output window, operand 0']
    %13 = vsyncpa [#allocation3], 0
    %s14 = scalar_lea.sflag [#allocation3], 1
    %15 = vsyncpa %s14, 0
    %16 = vsyncpa [#allocation6], 0
    %s17 = scalar_lea.sflag [#allocation6], 1
    %18 = vsyncpa %s17, 0
    %19 = vsyncpa [#allocation9], 0
    %20 = vsyncpa [#allocation4], 0
    %s21 = scalar_lea.sflag [#allocation4], 1
    %22 = vsyncpa %s21, 0
    loop: start=0, step=1, limit=4
    $region2: #{tpu_custom_call.1} parent=1 // loop_pre_header
      _
    $region3: #{tpu_custom_call.1} parent=1 // loop_header
      %s24 = sphi 0, %s28
      %p25 = scmp.ge.s32.totalorder %s24, 4
      %s34 = sphi 0, %s36
      %s37 = sphi 0, %s34
      %s38 = sphi 0, %s37
      %s54 = sphi 0, %s38
      %s60 = sphi 0, %s62
      %s63 = sphi 0, %s60
      %s64 = sphi 0, %s63
      %s80 = sphi 0, %s64
      %s84 = sphi 0, %s84
      %s86 = sphi 0, %s84
      %s87 = sphi 0, %s86
      %s101 = sphi 0, %s87
      %s105 = sphi 0, %s105
      %s107 = sphi 0, %s105
      %s108 = sphi 0, %s107
      %s122 = sphi 0, %s108
      %s126 = sphi 0, %s126
      %s128 = sphi 0, %s126
      %s129 = sphi 0, %s128
      %s143 = sphi 0, %s129
      %s147 = sphi 0, %s147
      %s149 = sphi 0, %s147
      %s150 = sphi 0, %s149
      %s164 = sphi 0, %s150
      %s168 = sphi 0, %s168
      %s170 = sphi 0, %s168
      %s171 = sphi 0, %s170
      %s185 = sphi 0, %s171
      %s189 = sphi 0, %s189
      %s191 = sphi 0, %s189
      %s192 = sphi 0, %s191
      %s206 = sphi 0, %s192
      %s212 = sphi 0, %s214
      %s215 = sphi 0, %s212
      %s216 = sphi 0, %s215
      %s232 = sphi 0, %s216
    $region4: #{tpu_custom_call.1} parent=1 // loop_header_branch
      %27 = sbr.rel (%p25) target = $region8
    $region5: #{tpu_custom_call.1} parent=1 // loop_body
      %s29 = ssub.s32 %s24, 1
      %s30 = ssub.s32 %s24, 2
      %s31 = sadd.s32 %s24, 1
      %s32 = ssub.s32 %s24, %s31
      %p33 = scmp.eq.s32.totalorder %s32, 0
      %s35 = sadd.s32 %s34, 1
      %s36 = scalar_select %p33, %s34, %s35
      %p39 = pneg %p33
      %p40 = scmp.eq.s32.totalorder %s24, 1
      %p41 = por %p39, %p40
      %p42 = scmp.ne.s32.totalorder %s34, %s37
      %p43 = scmp.eq.s32.totalorder %s24, 0
      %p44 = por %p42, %p43
      %p45 = scmp.ne.s32.totalorder %s34, %s37
      %p46 = scmp.eq.s32.totalorder %s29, 1
      %p47 = por %p45, %p46
      %p48 = scmp.ne.s32.totalorder %s37, %s38
      %p49 = scmp.eq.s32.totalorder %s29, 0
      %p50 = por %p48, %p49
      %p51 = scmp.ne.s32.totalorder %s37, %s38
      %p52 = scmp.eq.s32.totalorder %s30, 1
      %p53 = por %p51, %p52
      %p55 = scmp.ne.s32.totalorder %s38, %s54
      %p56 = scmp.eq.s32.totalorder %s30, 0
      %p57 = por %p55, %p56
      %s58 = ssub.s32 %s24, %s31
      %p59 = scmp.eq.s32.totalorder %s58, 0
      %s61 = sadd.s32 %s60, 1
      %s62 = scalar_select %p59, %s60, %s61
      %p65 = pneg %p59
      %p66 = scmp.eq.s32.totalorder %s24, 1
      %p67 = por %p65, %p66
      %p68 = scmp.ne.s32.totalorder %s60, %s63
      %p69 = scmp.eq.s32.totalorder %s24, 0
      %p70 = por %p68, %p69
      %p71 = scmp.ne.s32.totalorder %s60, %s63
      %p72 = scmp.eq.s32.totalorder %s29, 1
      %p73 = por %p71, %p72
      %p74 = scmp.ne.s32.totalorder %s63, %s64
      %p75 = scmp.eq.s32.totalorder %s29, 0
      %p76 = por %p74, %p75
      %p77 = scmp.ne.s32.totalorder %s63, %s64
      %p78 = scmp.eq.s32.totalorder %s30, 1
      %p79 = por %p77, %p78
      %p81 = scmp.ne.s32.totalorder %s64, %s80
      %p82 = scmp.eq.s32.totalorder %s30, 0
      %p83 = por %p81, %p82
      %s85 = sadd.s32 %s84, 1
      %p88 = scmp.eq.s32.totalorder %s24, 1
      %p89 = scmp.ne.s32.totalorder %s84, %s86
      %p90 = scmp.eq.s32.totalorder %s24, 0
      %p91 = por %p89, %p90
      %p92 = scmp.ne.s32.totalorder %s84, %s86
      %p93 = scmp.eq.s32.totalorder %s29, 1
      %p94 = por %p92, %p93
      %p95 = scmp.ne.s32.totalorder %s86, %s87
      %p96 = scmp.eq.s32.totalorder %s29, 0
      %p97 = por %p95, %p96
      %p98 = scmp.ne.s32.totalorder %s86, %s87
      %p99 = scmp.eq.s32.totalorder %s30, 1
      %p100 = por %p98, %p99
      %p102 = scmp.ne.s32.totalorder %s87, %s101
      %p103 = scmp.eq.s32.totalorder %s30, 0
      %p104 = por %p102, %p103
      %s106 = sadd.s32 %s105, 1
      %p109 = scmp.eq.s32.totalorder %s24, 1
      %p110 = scmp.ne.s32.totalorder %s105, %s107
      %p111 = scmp.eq.s32.totalorder %s24, 0
      %p112 = por %p110, %p111
      %p113 = scmp.ne.s32.totalorder %s105, %s107
      %p114 = scmp.eq.s32.totalorder %s29, 1
      %p115 = por %p113, %p114
      %p116 = scmp.ne.s32.totalorder %s107, %s108
      %p117 = scmp.eq.s32.totalorder %s29, 0
      %p118 = por %p116, %p117
      %p119 = scmp.ne.s32.totalorder %s107, %s108
      %p120 = scmp.eq.s32.totalorder %s30, 1
      %p121 = por %p119, %p120
      %p123 = scmp.ne.s32.totalorder %s108, %s122
      %p124 = scmp.eq.s32.totalorder %s30, 0
      %p125 = por %p123, %p124
      %s127 = sadd.s32 %s126, 1
      %p130 = scmp.eq.s32.totalorder %s24, 1
      %p131 = scmp.ne.s32.totalorder %s126, %s128
      %p132 = scmp.eq.s32.totalorder %s24, 0
      %p133 = por %p131, %p132
      %p134 = scmp.ne.s32.totalorder %s126, %s128
      %p135 = scmp.eq.s32.totalorder %s29, 1
      %p136 = por %p134, %p135
      %p137 = scmp.ne.s32.totalorder %s128, %s129
      %p138 = scmp.eq.s32.totalorder %s29, 0
      %p139 = por %p137, %p138
      %p140 = scmp.ne.s32.totalorder %s128, %s129
      %p141 = scmp.eq.s32.totalorder %s30, 1
      %p142 = por %p140, %p141
      %p144 = scmp.ne.s32.totalorder %s129, %s143
      %p145 = scmp.eq.s32.totalorder %s30, 0
      %p146 = por %p144, %p145
      %s148 = sadd.s32 %s147, 1
      %p151 = scmp.eq.s32.totalorder %s24, 1
      %p152 = scmp.ne.s32.totalorder %s147, %s149
      %p153 = scmp.eq.s32.totalorder %s24, 0
      %p154 = por %p152, %p153
      %p155 = scmp.ne.s32.totalorder %s147, %s149
      %p156 = scmp.eq.s32.totalorder %s29, 1
      %p157 = por %p155, %p156
      %p158 = scmp.ne.s32.totalorder %s149, %s150
      %p159 = scmp.eq.s32.totalorder %s29, 0
      %p160 = por %p158, %p159
      %p161 = scmp.ne.s32.totalorder %s149, %s150
      %p162 = scmp.eq.s32.totalorder %s30, 1
      %p163 = por %p161, %p162
      %p165 = scmp.ne.s32.totalorder %s150, %s164
      %p166 = scmp.eq.s32.totalorder %s30, 0
      %p167 = por %p165, %p166
      %s169 = sadd.s32 %s168, 1
      %p172 = scmp.eq.s32.totalorder %s24, 1
      %p173 = scmp.ne.s32.totalorder %s168, %s170
      %p174 = scmp.eq.s32.totalorder %s24, 0
      %p175 = por %p173, %p174
      %p176 = scmp.ne.s32.totalorder %s168, %s170
      %p177 = scmp.eq.s32.totalorder %s29, 1
      %p178 = por %p176, %p177
      %p179 = scmp.ne.s32.totalorder %s170, %s171
      %p180 = scmp.eq.s32.totalorder %s29, 0
      %p181 = por %p179, %p180
      %p182 = scmp.ne.s32.totalorder %s170, %s171
      %p183 = scmp.eq.s32.totalorder %s30, 1
      %p184 = por %p182, %p183
      %p186 = scmp.ne.s32.totalorder %s171, %s185
      %p187 = scmp.eq.s32.totalorder %s30, 0
      %p188 = por %p186, %p187
      %s190 = sadd.s32 %s189, 1
      %p193 = scmp.eq.s32.totalorder %s24, 1
      %p194 = scmp.ne.s32.totalorder %s189, %s191
      %p195 = scmp.eq.s32.totalorder %s24, 0
      %p196 = por %p194, %p195
      %p197 = scmp.ne.s32.totalorder %s189, %s191
      %p198 = scmp.eq.s32.totalorder %s29, 1
      %p199 = por %p197, %p198
      %p200 = scmp.ne.s32.totalorder %s191, %s192
      %p201 = scmp.eq.s32.totalorder %s29, 0
      %p202 = por %p200, %p201
      %p203 = scmp.ne.s32.totalorder %s191, %s192
      %p204 = scmp.eq.s32.totalorder %s30, 1
      %p205 = por %p203, %p204
      %p207 = scmp.ne.s32.totalorder %s192, %s206
      %p208 = scmp.eq.s32.totalorder %s30, 0
      %p209 = por %p207, %p208
      %s210 = ssub.s32 %s24, %s31
      %p211 = scmp.eq.s32.totalorder %s210, 0
      %s213 = sadd.s32 %s212, 1
      %s214 = scalar_select %p211, %s212, %s213
      %p217 = pneg %p211
      %p218 = scmp.eq.s32.totalorder %s24, 1
      %p219 = por %p217, %p218
      %p220 = scmp.ne.s32.totalorder %s212, %s215
      %p221 = scmp.eq.s32.totalorder %s24, 0
      %p222 = por %p220, %p221
      %p223 = scmp.ne.s32.totalorder %s212, %s215
      %p224 = scmp.eq.s32.totalorder %s29, 1
      %p225 = por %p223, %p224
      %p226 = scmp.ne.s32.totalorder %s215, %s216
      %p227 = scmp.eq.s32.totalorder %s29, 0
      %p228 = por %p226, %p227
      %p229 = scmp.ne.s32.totalorder %s215, %s216
      %p230 = scmp.eq.s32.totalorder %s30, 1
      %p231 = por %p229, %p230
      %p233 = scmp.ne.s32.totalorder %s216, %s232
      %p234 = scmp.eq.s32.totalorder %s30, 0
      %p235 = por %p233, %p234
      %p236 = scmp.le.s32.totalorder 1, %s24
      %p237 = scmp.lt.s32.totalorder %s24, 3
      %p238 = pnand %p236, %p237
      %p239 = pneg %p238
      // Predicated region
      $region9: #{tpu_custom_call.1} parent=5 // pred_check
        _
      $region10: #{tpu_custom_call.1} parent=5 // pred_check_branch
        %241 = sbr.rel (%p238) target = $region12
      $region11: #{tpu_custom_call.1} parent=5 // pred_region
        %s242 = ssub.s32 %s24, 1
        // Predicated region
        $region13: #{tpu_custom_call.1} parent=11 // pred_check
          %p243 = pneg %p97
        $region14: #{tpu_custom_call.1} parent=11 // pred_check_branch
          %245 = sbr.rel (%p243) target = $region16
        $region15: #{tpu_custom_call.1} parent=11 // pred_region
          %247 = vsyncadd [#allocation6], 0
          %s248 = sshll.u32 %s2, 4
          %s249 = int_to_ptr.hbm [resolvable:$true] %s248
          %s250 = sshll.u32 [#allocation7], 4
          %s251 = int_to_ptr.vmem [resolvable:$true] %s250
          %256 = dma.hbm_to_vmem [thread:$0]  %s249, 256, %s251, [#allocation6], 64, 64, 4
        $region16: #{tpu_custom_call.1} parent=11 // pred_fallthru
          _
        // Predicated region
        $region17: #{tpu_custom_call.1} parent=11 // pred_check
          %p257 = pneg %p118
        $region18: #{tpu_custom_call.1} parent=11 // pred_check_branch
          %259 = sbr.rel (%p257) target = $region20
        $region19: #{tpu_custom_call.1} parent=11 // pred_region
          _
        $region20: #{tpu_custom_call.1} parent=11 // pred_fallthru
          _
        // Predicated region
        $region21: #{tpu_custom_call.1} parent=11 // pred_check
          %p260 = pneg %p139
        $region22: #{tpu_custom_call.1} parent=11 // pred_check_branch
          %262 = sbr.rel (%p260) target = $region24
        $region23: #{tpu_custom_call.1} parent=11 // pred_region
          %264 = vsyncadd [#allocation9], 0
          %s265 = sshll.u32 %s4, 4
          %s266 = int_to_ptr.hbm [resolvable:$true] %s265
          %s267 = sshll.u32 [#allocation8], 4
          %s268 = int_to_ptr.vmem [resolvable:$true] %s267
          %273 = dma.hbm_to_vmem [thread:$0]  %s266, 256, %s268, [#allocation9], 64, 64, 4
        $region24: #{tpu_custom_call.1} parent=11 // pred_fallthru
          _
        // Predicated region
        $region25: #{tpu_custom_call.1} parent=11 // pred_check
          %p274 = pneg %p160
        $region26: #{tpu_custom_call.1} parent=11 // pred_check_branch
          %276 = sbr.rel (%p274) target = $region28
        $region27: #{tpu_custom_call.1} parent=11 // pred_region
          _
        $region28: #{tpu_custom_call.1} parent=11 // pred_fallthru
          _
        // Predicated region
        $region29: #{tpu_custom_call.1} parent=11 // pred_check
          %p277 = pneg %p181
        $region30: #{tpu_custom_call.1} parent=11 // pred_check_branch
          %279 = sbr.rel (%p277) target = $region32
        $region31: #{tpu_custom_call.1} parent=11 // pred_region
          %281 = vsyncadd [#allocation9], 0
          %s282 = sshll.u32 %s6, 4
          %s283 = int_to_ptr.hbm [resolvable:$true] %s282
          %s284 = sshll.u32 [#allocation10], 4
          %s285 = int_to_ptr.vmem [resolvable:$true] %s284
          %290 = dma.hbm_to_vmem [thread:$0]  %s283, 256, %s285, [#allocation9], 64, 64, 4
        $region32: #{tpu_custom_call.1} parent=11 // pred_fallthru
          _
        // Predicated region
        $region33: #{tpu_custom_call.1} parent=11 // pred_check
          %p291 = pneg %p202
        $region34: #{tpu_custom_call.1} parent=11 // pred_check_branch
          %293 = sbr.rel (%p291) target = $region36
        $region35: #{tpu_custom_call.1} parent=11 // pred_region
          _
        $region36: #{tpu_custom_call.1} parent=11 // pred_fallthru
          _
      $region12: #{tpu_custom_call.1} parent=5 // pred_fallthru
        _
      %p294 = scmp.lt.s32.totalorder %s24, 2
      // Predicated region
      $region37: #{tpu_custom_call.1} parent=5 // pred_check
        %p295 = pneg %p294
      $region38: #{tpu_custom_call.1} parent=5 // pred_check_branch
        %297 = sbr.rel (%p295) target = $region40
      $region39: #{tpu_custom_call.1} parent=5 // pred_region
        // Predicated region
        $region41: #{tpu_custom_call.1} parent=39 // pred_check
          %p298 = pneg %p44
        $region42: #{tpu_custom_call.1} parent=39 // pred_check_branch
          %300 = sbr.rel (%p298) target = $region44
        $region43: #{tpu_custom_call.1} parent=39 // pred_region
          %s301 = sand.u32 %s34, 1
          %s302 = scalar_lea.sflag [#allocation3], %s301
          %s303 = sand.u32 %s34, 1
          %s304 = smul.addr %s303, 8
          %s305 = scalar_lea.vmem [#allocation2], %s304
          %307 = vsyncadd %s302, 0
          %s308 = smul.addr %s24, 8
          %s309 = scalar_lea.hbm %s0, %s308
          %s311 = sshll.u32 %s309, 4
          %s312 = int_to_ptr.hbm [resolvable:$true] %s311
          %s313 = sshll.u32 %s305, 4
          %s314 = int_to_ptr.vmem [resolvable:$true] %s313
          %316 = dma.hbm_to_vmem [thread:$0]  %s312, 128, %s314, %s302
        $region44: #{tpu_custom_call.1} parent=39 // pred_fallthru
          _
        // Predicated region
        $region45: #{tpu_custom_call.1} parent=39 // pred_check
          %p317 = pneg %p70
        $region46: #{tpu_custom_call.1} parent=39 // pred_check_branch
          %319 = sbr.rel (%p317) target = $region48
        $region47: #{tpu_custom_call.1} parent=39 // pred_region
          %s320 = sand.u32 %s24, 1
          %s321 = scalar_lea.sflag [#allocation6], %s320
          %s322 = sand.u32 %s60, 1
          %s323 = smul.addr %s322, 8
          %s324 = scalar_lea.vmem [#allocation5], %s323
          %326 = vsyncadd %s321, 0
          %s327 = smul.addr %s24, 8
          %s328 = scalar_lea.hbm %s1, %s327
          %s330 = sshll.u32 %s328, 4
          %s331 = int_to_ptr.hbm [resolvable:$true] %s330
          %s332 = sshll.u32 %s324, 4
          %s333 = int_to_ptr.vmem [resolvable:$true] %s332
          %335 = dma.hbm_to_vmem [thread:$0]  %s331, 128, %s333, %s321
        $region48: #{tpu_custom_call.1} parent=39 // pred_fallthru
          _
      $region40: #{tpu_custom_call.1} parent=5 // pred_fallthru
        _
      %p336 = scmp.le.s32.totalorder 1, %s24
      %p337 = scmp.lt.s32.totalorder %s24, 3
      %p338 = pnand %p336, %p337
      %p339 = pneg %p338
      // Predicated region
      $region49: #{tpu_custom_call.1} parent=5 // pred_check
        _
      $region50: #{tpu_custom_call.1} parent=5 // pred_check_branch
        %341 = sbr.rel (%p338) target = $region52
      $region51: #{tpu_custom_call.1} parent=5 // pred_region
        %s342 = ssub.s32 %s24, 1
        %s343 = sand.u32 %s37, 1
        %s344 = scalar_lea.sflag [#allocation3], %s343
        %s345 = sand.u32 %s37, 1
        %s346 = smul.addr %s345, 8
        %s347 = scalar_lea.vmem [#allocation2], %s346
        // Predicated region
        $region53: #{tpu_custom_call.1} parent=51 // pred_check
          %p348 = pneg %p50
        $region54: #{tpu_custom_call.1} parent=51 // pred_check_branch
          %350 = sbr.rel (%p348) target = $region56
        $region55: #{tpu_custom_call.1} parent=51 // pred_region
          %352 = dma.done %s344, 128
        $region56: #{tpu_custom_call.1} parent=51 // pred_fallthru
          _
        %s353 = sand.u32 %s29, 1
        %s354 = scalar_lea.sflag [#allocation6], %s353
        %s355 = sand.u32 %s63, 1
        %s356 = smul.addr %s355, 8
        %s357 = scalar_lea.vmem [#allocation5], %s356
        // Predicated region
        $region57: #{tpu_custom_call.1} parent=51 // pred_check
          %p358 = pneg %p76
        $region58: #{tpu_custom_call.1} parent=51 // pred_check_branch
          %360 = sbr.rel (%p358) target = $region60
        $region59: #{tpu_custom_call.1} parent=51 // pred_region
          %362 = dma.done %s354, 128
        $region60: #{tpu_custom_call.1} parent=51 // pred_fallthru
          _
        // Predicated region
        $region61: #{tpu_custom_call.1} parent=51 // pred_check
          %p363 = pneg %p97
        $region62: #{tpu_custom_call.1} parent=51 // pred_check_branch
          %365 = sbr.rel (%p363) target = $region64
        $region63: #{tpu_custom_call.1} parent=51 // pred_region
          %367 = dma.done [#allocation6], 256
        $region64: #{tpu_custom_call.1} parent=51 // pred_fallthru
          _
        // Predicated region
        $region65: #{tpu_custom_call.1} parent=51 // pred_check
          %p368 = pneg %p139
        $region66: #{tpu_custom_call.1} parent=51 // pred_check_branch
          %370 = sbr.rel (%p368) target = $region68
        $region67: #{tpu_custom_call.1} parent=51 // pred_region
          %372 = dma.done [#allocation9], 256
        $region68: #{tpu_custom_call.1} parent=51 // pred_fallthru
          _
        // Predicated region
        $region69: #{tpu_custom_call.1} parent=51 // pred_check
          %p373 = pneg %p181
        $region70: #{tpu_custom_call.1} parent=51 // pred_check_branch
          %375 = sbr.rel (%p373) target = $region72
        $region71: #{tpu_custom_call.1} parent=51 // pred_region
          %377 = dma.done [#allocation9], 256
        $region72: #{tpu_custom_call.1} parent=51 // pred_fallthru
          _
        %s378 = sand.u32 %s37, 1
        %s379 = scalar_lea.sflag [#allocation3], %s378
        %s380 = sand.u32 %s37, 1
        %s381 = smul.addr %s380, 8
        %s382 = scalar_lea.vmem [#allocation2], %s381
        %p383 = pneg %p50
        %p384 = pneg %p47
        %s385 = sand.u32 %s29, 1
        %s386 = scalar_lea.sflag [#allocation6], %s385
        %s387 = sand.u32 %s63, 1
        %s388 = smul.addr %s387, 8
        %s389 = scalar_lea.vmem [#allocation5], %s388
        %p390 = pneg %p76
        %p391 = pneg %p73
        %p392 = pneg %p97
        %p393 = pneg %p94
        %p394 = pneg %p118
        %p395 = pneg %p115
        %p396 = pneg %p139
        %p397 = pneg %p136
        %p398 = pneg %p160
        %p399 = pneg %p157
        %p400 = pneg %p181
        %p401 = pneg %p178
        %p402 = pneg %p202
        %p403 = pneg %p199
        %p404 = pneg %p228
        %p405 = pneg %p225
        %s406 = sand.u32 %s215, 1
        %s407 = scalar_lea.sflag [#allocation4], %s406
        %s408 = sand.u32 %s215, 1
        %s409 = smul.addr %s408, 8
        %s410 = scalar_lea.vmem [#allocation11], %s409
        %v412 = vld [vmem:[%s347] sm:$0xff]
        %v413 = vld [vmem:[%s357] sm:$0xff]
        %v414 = vsub.f32 0.0, %v413
        %v415 = vmul.f32 %v414, 1.442695
        %v416 = vpow.pop %v415
        %v417 = vadd.f32 %v416, 1.0
        %v418 = vrcp.pop %v417
        %v419 = vmul.f32 %v413, %v418
        %v420 = vpack.c.bf16 %v419, %v419
        %v421 = vld [vmem:[#allocation7] sm:$0xf]
        %v422 = vld [vmem:[#allocation7 + $0x4] sm:$0xf]
        %v423 = vld [vmem:[#allocation7 + $0x8] sm:$0xf]
        %v424 = vld [vmem:[#allocation7 + $0xc] sm:$0xf]
        %v425 = vld [vmem:[%s3] sm:$0x1]
        %v427 = vperm.slane %v425, 0
        %v433 = vunpack.c.l.b16 %v421
        %v434 = vunpack.c.l.b16 %v422
        %v435 = vunpack.c.l.b16 %v423
        %v436 = vunpack.c.l.b16 %v424
        %v437 = vpack.c.b16 %v434, %v433
        %v438 = vpack.c.b16 %v436, %v435
        %vm441 = vcmask 261120
        %v443 = vsel %vm441, %v420, 0
        %445 = vmatpush.bf16.msra.mxu0 0
        %446 = vmatpush.bf16.msra.mxu0 0
        %447 = vmatpush.bf16.msra.mxu0 0
        %448 = vmatpush.bf16.msra.mxu0 0
        %449 = vmatpush.bf16.msra.mxu0 0
        %450 = vmatpush.bf16.msra.mxu0 0
        %451 = vmatpush.bf16.msra.mxu0 %v438
        %452 = vmatpush.bf16.msra.mxu0 %v437
        %453 = vmatmul.bf16.gmra.mxu0 %v443
        %v454 = vpop.f32.mrf.mxu0
        %v455 = vadd.f32 %v427, %v454
        %v456 = vpop.f32.mrf.mxu0
        %457 = vdwg.mxu0
        %v458 = vld [vmem:[#allocation8] sm:$0xf]
        %v459 = vld [vmem:[#allocation8 + $0x4] sm:$0xf]
        %v460 = vld [vmem:[#allocation8 + $0x8] sm:$0xf]
        %v461 = vld [vmem:[#allocation8 + $0xc] sm:$0xf]
        %v462 = vld [vmem:[%s5] sm:$0x1]
        %v464 = vperm.slane %v462, 0
        %v470 = vunpack.c.l.b16 %v458
        %v471 = vunpack.c.l.b16 %v459
        %v472 = vunpack.c.l.b16 %v460
        %v473 = vunpack.c.l.b16 %v461
        %v474 = vpack.c.b16 %v471, %v470
        %v475 = vpack.c.b16 %v473, %v472
        %478 = vmatpush.bf16.msra.mxu0 0
        %479 = vmatpush.bf16.msra.mxu0 0
        %480 = vmatpush.bf16.msra.mxu0 0
        %481 = vmatpush.bf16.msra.mxu0 0
        %482 = vmatpush.bf16.msra.mxu0 0
        %483 = vmatpush.bf16.msra.mxu0 0
        %484 = vmatpush.bf16.msra.mxu0 %v475
        %485 = vmatpush.bf16.msra.mxu0 %v474
        %486 = vmatmul.bf16.gmra.mxu0 %v443
        %v487 = vpop.f32.mrf.mxu0
        %v488 = vadd.f32 %v464, %v487
        %v489 = vpop.f32.mrf.mxu0
        %490 = vdwg.mxu0
        %v491 = vsel %vm441, %v412, 0.0
        %492 = vadd.xlane.f32.xlu0 %v491
        %v493 = vpop.xlane.xlu0 %492
        %v494 = vrcp.pop 32.0
        %v495 = vmul.f32 32.0, %v494
        %v496 = vsub.f32 1.0, %v495
        %v497 = vmul.f32 %v494, %v496
        %v498 = vadd.f32 %v494, %v497
        %vm499 = vweird.f32 %v494
        %v500 = vsel %vm499, %v494, %v498
        %v501 = vmul.f32 %v493, %v500
        %v502 = vsub.f32 %v412, %v501
        %v503 = vmul.f32 %v502, %v502
        %v504 = vsel %vm441, %v503, 0.0
        %505 = vadd.xlane.f32.xlu0 %v504
        %v506 = vpop.xlane.xlu0 %505
        %v507 = vmul.f32 %v506, %v500
        %v508 = vadd.f32 %v507, 1e-06
        %v509 = vrsqrt.pop %v508
        %v510 = vmul.f32 %v509, %v508
        %v511 = vmul.f32 %v510, %v509
        %v512 = vmul.f32 0.5, %v511
        %v513 = vsub.f32 1.5, %v512
        %v514 = vmul.f32 %v509, %v513
        %vm515 = vweird.f32 %v508
        %vm516 = vweird.f32 %v509
        %vm517 = vmor %vm515, %vm516
        %v518 = vsel %vm517, %v509, %v514
        %v519 = vmul.f32 %v502, %v518
        %v520 = vadd.f32 %v488, 1.0
        %v521 = vmul.f32 %v519, %v520
        %v522 = vadd.f32 %v521, %v455
        %v523 = vpack.c.bf16 %v522, %v522
        %v524 = vld [vmem:[#allocation10] sm:$0xf]
        %v525 = vld [vmem:[#allocation10 + $0x4] sm:$0xf]
        %v526 = vld [vmem:[#allocation10 + $0x8] sm:$0xf]
        %v527 = vld [vmem:[#allocation10 + $0xc] sm:$0xf]
        %v528 = vld [vmem:[%s7] sm:$0x1]
        %v530 = vperm.slane %v528, 0
        %v536 = vunpack.c.l.b16 %v524
        %v537 = vunpack.c.l.b16 %v525
        %v538 = vunpack.c.l.b16 %v526
        %v539 = vunpack.c.l.b16 %v527
        %v540 = vpack.c.b16 %v537, %v536
        %v541 = vpack.c.b16 %v539, %v538
        %v545 = vsel %vm441, %v523, 0
        %547 = vmatpush.bf16.msra.mxu0 0
        %548 = vmatpush.bf16.msra.mxu0 0
        %549 = vmatpush.bf16.msra.mxu0 0
        %550 = vmatpush.bf16.msra.mxu0 0
        %551 = vmatpush.bf16.msra.mxu0 0
        %552 = vmatpush.bf16.msra.mxu0 0
        %553 = vmatpush.bf16.msra.mxu0 %v541
        %554 = vmatpush.bf16.msra.mxu0 %v540
        %555 = vmatmul.bf16.gmra.mxu0 %v545
        %v556 = vpop.f32.mrf.mxu0
        %v557 = vadd.f32 %v530, %v556
        %v558 = vpop.f32.mrf.mxu0
        %559 = vdwg.mxu0
        %560 = vst [vmem:[%s410] sm:$0xff] %v557
        %s561 = sand.u32 %s215, 1
        %s562 = scalar_lea.sflag [#allocation4], %s561
        %s563 = sand.u32 %s215, 1
        %s564 = smul.addr %s563, 8
        %s565 = scalar_lea.vmem [#allocation11], %s564
        // Predicated region
        $region73: #{tpu_custom_call.1} parent=51 // pred_check
          %p566 = pneg %p225
        $region74: #{tpu_custom_call.1} parent=51 // pred_check_branch
          %568 = sbr.rel (%p566) target = $region76
        $region75: #{tpu_custom_call.1} parent=51 // pred_region
          %570 = vsyncadd %s562, 0
          %s571 = smul.addr %s29, 8
          %s572 = scalar_lea.hbm %s8, %s571
          %s574 = sshll.u32 %s565, 4
          %s575 = int_to_ptr.vmem [resolvable:$true] %s574
          %s576 = sshll.u32 %s572, 4
          %s577 = int_to_ptr.hbm [resolvable:$true] %s576
          %579 = dma.vmem_to_hbm [thread:$0]  %s575, 128, %s577, %s562
        $region76: #{tpu_custom_call.1} parent=51 // pred_fallthru
          _
      $region52: #{tpu_custom_call.1} parent=5 // pred_fallthru
        _
      %p580 = scmp.le.s32.totalorder 2, %s24
      // Predicated region
      $region77: #{tpu_custom_call.1} parent=5 // pred_check
        %p581 = pneg %p580
      $region78: #{tpu_custom_call.1} parent=5 // pred_check_branch
        %583 = sbr.rel (%p581) target = $region80
      $region79: #{tpu_custom_call.1} parent=5 // pred_region
        %s584 = ssub.s32 %s24, 2
        // Predicated region
        $region81: #{tpu_custom_call.1} parent=79 // pred_check
          %p585 = pneg %p231
        $region82: #{tpu_custom_call.1} parent=79 // pred_check_branch
          %587 = sbr.rel (%p585) target = $region84
        $region83: #{tpu_custom_call.1} parent=79 // pred_region
          %s588 = sand.u32 %s216, 1
          %s589 = scalar_lea.sflag [#allocation4], %s588
          %s590 = sand.u32 %s216, 1
          %s591 = smul.addr %s590, 8
          %s592 = scalar_lea.vmem [#allocation11], %s591
          %594 = dma.done %s589, 128
        $region84: #{tpu_custom_call.1} parent=79 // pred_fallthru
          _
      $region80: #{tpu_custom_call.1} parent=5 // pred_fallthru
        _
    $region6: #{tpu_custom_call.1} parent=1 // loop_footer
      %s28 = sadd.s32 1, %s24
    $region7: #{tpu_custom_call.1} parent=1 // loop_footer_branch
      %23 = sbr.rel target = $region3
    $region8: #{tpu_custom_call.1} parent=1 // loop_exit
      _
    %595 = vsyncpa [#allocation3], 1
    %s596 = scalar_lea.sflag [#allocation3], 1
    %597 = vsyncpa %s596, 1
    %598 = vsyncpa [#allocation6], 1
    %s599 = scalar_lea.sflag [#allocation6], 1
    %600 = vsyncpa %s599, 1
    %601 = vsyncpa [#allocation9], 1
    %602 = vsyncpa [#allocation4], 1
    %s603 = scalar_lea.sflag [#allocation4], 1
    %604 = vsyncpa %s603, 1

</llo_original>
